<compile_context>
chip_gen: v7x
topology: tpu7x:2x2x1
jax: 0.10.0
libtpu: 0.0.40
codegen_flags: <defaults>
</compile_context>

<pallas_src>
import math

import jax
import jax.numpy as jnp
from jax import lax
from jax.experimental import pallas as pl
from jax.experimental.pallas import tpu as pltpu


def _round_up(x, m):
    return ((x + m - 1) // m) * m


# ----------------------------------------------------------------------------
# Pallas kernel: fused 3-layer MLP (Linear -> ReLU -> Linear -> ReLU -> Linear)
# Processes one batch tile of TB rows per grid step.  Output block is the
# TRANSPOSED result (n_out, TB): batch on the lane axis => lane-dense store.
# ----------------------------------------------------------------------------
def _critic_mlp_kernel(state_ref, action_ref, w1s_ref, w1a_ref, w2_ref,
                       w3t_ref, b12_ref, b3_ref, o_ref):
    w_dt = w1s_ref.dtype
    # Cast activations to the weight dtype only at MXU dot inputs (no-op for
    # f32 weights).  Bias-add / ReLU stay f32 (v5e VPU has no bf16 arithmetic).
    cast = (lambda t: t.astype(w_dt)) if w_dt != jnp.float32 else (lambda t: t)
    n_out = o_ref.shape[0]

    s = state_ref[...]                               # (TB, S)  f32
    a = action_ref[...]                              # (TB, A)  f32

    # Layer 1: h1 = relu(state @ W1[:S] + action @ W1[S:] + b1)
    # Two partial dots against pre-split, un-sliced refs == concat-then-dot
    # (both accumulate in f32), with no per-step relayout.
    h1 = jnp.dot(cast(s), w1s_ref[...], preferred_element_type=jnp.float32)
    h1 = h1 + jnp.dot(cast(a), w1a_ref[...], preferred_element_type=jnp.float32)
    h1 = jnp.maximum(h1 + b12_ref[0:1, :], 0.0)      # f32 VPU path

    # Layer 2: h2 = relu(h1 @ W2 + b2)
    h2 = jnp.dot(cast(h1), w2_ref[...], preferred_element_type=jnp.float32)
    h2 = jnp.maximum(h2 + b12_ref[1:2, :], 0.0)

    # Layer 3, directly in transposed form (batch on lanes):
    #   q_t[o, b] = sum_f w3t[o, f] * h2[b, f]   (attention-style A @ B.T)
    q_t = lax.dot_general(
        cast(w3t_ref[...]), cast(h2),
        dimension_numbers=(((1,), (1,)), ((), ())),
        preferred_element_type=jnp.float32)          # (n_out_pad, TB)
    o_ref[...] = (q_t[:n_out, :] + b3_ref[...]).astype(o_ref.dtype)


# ----------------------------------------------------------------------------
# Wrapper matching DenseCriticNetwork.forward(state, action)
# ----------------------------------------------------------------------------
def critic_forward(state, action, params, *, batch_tile=1024):
    w1, b1, w2, b2, w3, b3 = params

    state = state.astype(jnp.float32)    # torch: state.float() / action.float()
    action = action.astype(jnp.float32)

    b_sz, s_dim = state.shape
    a_dim = action.shape[1]
    d_in, n_feat = w1.shape
    assert d_in == s_dim + a_dim, (d_in, s_dim, a_dim)
    n_out = w3.shape[1]

    # One-time tiny weight massaging in the wrapper (free vs. per-step relayout):
    #   * split W1 at the state/action boundary (offset 6 is not sublane-aligned)
    #   * transpose W3 so layer 3 emits (n_out, TB); pad its rows to a multiple
    #     of 8 so the MXU M-dim is never degenerate (pad rows are sliced off
    #     inside the kernel before the store).
    w1s = w1[:s_dim, :]
    w1a = w1[s_dim:, :]
    n_out_p = _round_up(n_out, 8)
    w3t = jnp.pad(jnp.transpose(w3), ((0, n_out_p - n_out), (0, 0)))

    # Biases: b1/b2 packed into one (2, n_feat) DMA; b3 as an (n_out, 1) column
    # (broadcasts along the lane/batch axis of the transposed output).
    b12 = jnp.stack([jnp.reshape(b1, (-1,)),
                     jnp.reshape(b2, (-1,))]).astype(jnp.float32)
    b3c = jnp.reshape(b3, (n_out, 1)).astype(jnp.float32)

    # Batch tiling: no input padding (Pallas handles the ragged final block;
    # rows are independent so edge garbage cannot contaminate valid rows).
    # Multi-step tiles are multiples of 128 (lane-dense (n_out, tb) stores) and
    # the grid has >= 2 steps for b > 256 so both v7x TensorCores get work.
    if b_sz <= 256:
        tb = b_sz                                    # single grid step
    else:
        tb = min(_round_up(batch_tile, 128),
                 _round_up(pl.cdiv(b_sz, 2), 128))
    n_tiles = pl.cdiv(b_sz, tb)

    itemsize = lambda t: t.size * t.dtype.itemsize
    flops = 2 * b_sz * (d_in * n_feat + n_feat * n_feat + n_feat * n_out_p)
    bytes_accessed = (4 * b_sz * (s_dim + a_dim + n_out)
                      + itemsize(w1s) + itemsize(w1a) + itemsize(w2)
                      + itemsize(w3t) + itemsize(b12) + itemsize(b3c))

    q_t = pl.pallas_call(
        _critic_mlp_kernel,
        out_shape=jax.ShapeDtypeStruct((n_out, b_sz), jnp.float32),
        grid=(n_tiles,),
        in_specs=[
            pl.BlockSpec((tb, s_dim), lambda i: (i, 0)),        # state tile
            pl.BlockSpec((tb, a_dim), lambda i: (i, 0)),        # action tile
            pl.BlockSpec((s_dim, n_feat), lambda i: (0, 0)),    # W1[:S]  (resident)
            pl.BlockSpec((a_dim, n_feat), lambda i: (0, 0)),    # W1[S:]  (resident)
            pl.BlockSpec((n_feat, n_feat), lambda i: (0, 0)),   # W2      (resident)
            pl.BlockSpec((n_out_p, n_feat), lambda i: (0, 0)),  # W3^T    (resident)
            pl.BlockSpec((2, n_feat), lambda i: (0, 0)),        # [b1; b2]
            pl.BlockSpec((n_out, 1), lambda i: (0, 0)),         # b3 column
        ],
        out_specs=pl.BlockSpec((n_out, tb), lambda i: (0, i)),  # batch on lanes
        compiler_params=pltpu.CompilerParams(
            dimension_semantics=("parallel",),       # megacore sharding on v7x
            vmem_limit_bytes=32 * 1024 * 1024,
        ),
        cost_estimate=pl.CostEstimate(
            flops=int(flops), transcendentals=0,
            bytes_accessed=int(bytes_accessed)),
    )(state, action, w1s, w1a, w2, w3t, b12, b3c)

    # (n_out, B) -> (B, n_out) (free when n_out == 1), then torch.squeeze.
    return jnp.squeeze(jnp.transpose(q_t))


# ----------------------------------------------------------------------------
# Plain-JAX reference (same math as the PyTorch module; mirrors the kernel's
# cast-at-dot-input behaviour so it is valid for both f32 and bf16 weights).
# ----------------------------------------------------------------------------
def _reference(state, action, params):
    w1, b1, w2, b2, w3, b3 = params
    x = jnp.concatenate((state.astype(jnp.float32),
                         action.astype(jnp.float32)), axis=1)

    def lin(x, w, b):
        y = jnp.dot(x.astype(w.dtype), w, preferred_element_type=jnp.float32)
        return y + b.astype(jnp.float32)

    h1 = jnp.maximum(lin(x, w1, b1), 0.0)
    h2 = jnp.maximum(lin(h1, w2, b2), 0.0)
    return jnp.squeeze(lin(h2, w3, b3))


# ----------------------------------------------------------------------------
# Deterministic parameter init (mirrors the PyTorch __init__)
# ----------------------------------------------------------------------------
def _xavier_uniform(key, fan_in, fan_out, gain, dtype):
    bound = gain * math.sqrt(6.0 / (fan_in + fan_out))
    return jax.random.uniform(key, (fan_in, fan_out), jnp.float32,
                              -bound, bound).astype(dtype)


def _linear_bias(key, fan_in, fan_out):
    # nn.Linear default bias init: U(-1/sqrt(fan_in), 1/sqrt(fan_in))
    bound = 1.0 / math.sqrt(fan_in)
    return jax.random.uniform(key, (fan_out,), jnp.float32, -bound, bound)


def init_params(key, n_input, n_features, n_output, dtype=jnp.float32):
    ks = jax.random.split(key, 6)
    gain_relu = math.sqrt(2.0)   # nn.init.calculate_gain('relu')
    gain_lin = 1.0               # nn.init.calculate_gain('linear')
    w1 = _xavier_uniform(ks[0], n_input, n_features, gain_relu, dtype)
    b1 = _linear_bias(ks[1], n_input, n_features)
    w2 = _xavier_uniform(ks[2], n_features, n_features, gain_relu, dtype)
    b2 = _linear_bias(ks[3], n_features, n_features)
    w3 = _xavier_uniform(ks[4], n_features, n_output, gain_lin, dtype)
    b3 = _linear_bias(ks[5], n_features, n_output)
    return (w1, b1, w2, b2, w3, b3)


# ----------------------------------------------------------------------------
if __name__ == "__main__":
    key = jax.random.PRNGKey(0)
    k_state, k_action, k_params = jax.random.split(key, 3)

    # Small shapes consistent with the module: state dim 6, action dim 2
    # -> n_input = 8, hidden n_features = 32, n_output = 1 (scalar Q / row).
    B, S_DIM, A_DIM, N_FEATURES, N_OUTPUT = 8, 6, 2, 32, 1
    N_INPUT = S_DIM + A_DIM

    state = jax.random.normal(k_state, (B, S_DIM), jnp.float32)
    action = jax.random.normal(k_action, (B, A_DIM), jnp.float32)

    # --- f32 weights: exact forward-pass semantics of the PyTorch module ---
    params_f32 = init_params(k_params, N_INPUT, N_FEATURES, N_OUTPUT,
                             dtype=jnp.float32)
    q = critic_forward(state, action, params_f32)
    jax.block_until_ready(q)
    q_ref = _reference(state, action, params_f32)
    assert q.shape == (B,), q.shape
    assert jnp.allclose(q, q_ref, atol=1e-4, rtol=1e-4)

    # --- bf16 weight storage (halved weight DMA/VMEM; MXU-native bf16) -----
    params_bf16 = tuple(p.astype(jnp.bfloat16) if p.ndim == 2 else p
                        for p in params_f32)
    q16 = critic_forward(state, action, params_bf16)
    jax.block_until_ready(q16)
    q16_ref = _reference(state, action, params_bf16)
    assert q16.shape == (B,), q16.shape
    assert jnp.allclose(q16, q16_ref, atol=5e-2, rtol=5e-2)

    print("KERNEL_OK")
</pallas_src>

<mosaic_0001>
module attributes {stable_mosaic.version = 11 : i64} {
  func.func @_critic_mlp_kernel(%arg0: i32, %arg1: memref<8x6xf32, #tpu.memory_space<vmem>>, %arg2: memref<8x2xf32, #tpu.memory_space<vmem>>, %arg3: memref<6x32xf32, #tpu.memory_space<vmem>>, %arg4: memref<2x32xf32, #tpu.memory_space<vmem>>, %arg5: memref<32x32xf32, #tpu.memory_space<vmem>>, %arg6: memref<8x32xf32, #tpu.memory_space<vmem>>, %arg7: memref<2x32xf32, #tpu.memory_space<vmem>>, %arg8: memref<1x1xf32, #tpu.memory_space<vmem>>, %arg9: memref<1x8xf32, #tpu.memory_space<vmem>>) attributes {dimension_semantics = [#tpu.dimension_semantics<parallel>], iteration_bounds = array<i64: 1>, scalar_prefetch = 0 : i64, scratch_operands = 0 : i64, tpu.core_type = #tpu.core_type<tc>, window_params = [{transform_indices = @transform_0, window_bounds = array<i64: 8, 6>}, {transform_indices = @transform_1, window_bounds = array<i64: 8, 2>}, {pipeline_mode = #tpu.pipeline_mode<synchronous>, transform_indices = @transform_2, window_bounds = array<i64: 6, 32>}, {pipeline_mode = #tpu.pipeline_mode<synchronous>, transform_indices = @transform_3, window_bounds = array<i64: 2, 32>}, {pipeline_mode = #tpu.pipeline_mode<synchronous>, transform_indices = @transform_4, window_bounds = array<i64: 32, 32>}, {pipeline_mode = #tpu.pipeline_mode<synchronous>, transform_indices = @transform_5, window_bounds = array<i64: 8, 32>}, {pipeline_mode = #tpu.pipeline_mode<synchronous>, transform_indices = @transform_6, window_bounds = array<i64: 2, 32>}, {pipeline_mode = #tpu.pipeline_mode<synchronous>, transform_indices = @transform_7, window_bounds = array<i64: 1, 1>}, {transform_indices = @transform_8, window_bounds = array<i64: 1, 8>}]} {
    %c0 = arith.constant 0 : index
    %c0_0 = arith.constant 0 : index
    %0 = vector.load %arg1[%c0, %c0_0] : memref<8x6xf32, #tpu.memory_space<vmem>>, vector<8x6xf32>
    %c0_1 = arith.constant 0 : index
    %c0_2 = arith.constant 0 : index
    %1 = vector.load %arg2[%c0_1, %c0_2] : memref<8x2xf32, #tpu.memory_space<vmem>>, vector<8x2xf32>
    %c0_3 = arith.constant 0 : index
    %c0_4 = arith.constant 0 : index
    %2 = vector.load %arg3[%c0_3, %c0_4] : memref<6x32xf32, #tpu.memory_space<vmem>>, vector<6x32xf32>
    %cst = arith.constant dense<0.000000e+00> : vector<8x32xf32>
    %3 = tpu.matmul %0, %2, %cst {dimension_numbers = #tpu.dot_dimension_numbers<[1], [0], [0], [1], [0, 0, 1, 1], [], []>} : vector<8x6xf32>, vector<6x32xf32>, vector<8x32xf32> -> vector<8x32xf32>
    %c0_5 = arith.constant 0 : index
    %c0_6 = arith.constant 0 : index
    %4 = vector.load %arg4[%c0_5, %c0_6] : memref<2x32xf32, #tpu.memory_space<vmem>>, vector<2x32xf32>
    %cst_7 = arith.constant dense<0.000000e+00> : vector<8x32xf32>
    %5 = tpu.matmul %1, %4, %cst_7 {dimension_numbers = #tpu.dot_dimension_numbers<[1], [0], [0], [1], [0, 0, 1, 1], [], []>} : vector<8x2xf32>, vector<2x32xf32>, vector<8x32xf32> -> vector<8x32xf32>
    %6 = arith.addf %3, %5 : vector<8x32xf32>
    %c0_8 = arith.constant 0 : index
    %c0_9 = arith.constant 0 : index
    %7 = vector.load %arg7[%c0_8, %c0_9] : memref<2x32xf32, #tpu.memory_space<vmem>>, vector<1x32xf32>
    %8 = vector.broadcast %7 : vector<1x32xf32> to vector<8x32xf32>
    %9 = arith.addf %6, %8 : vector<8x32xf32>
    %cst_10 = arith.constant 0.000000e+00 : f32
    %10 = vector.broadcast %cst_10 : f32 to vector<8x32xf32>
    %11 = arith.maximumf %9, %10 : vector<8x32xf32>
    %c0_11 = arith.constant 0 : index
    %c0_12 = arith.constant 0 : index
    %12 = vector.load %arg5[%c0_11, %c0_12] : memref<32x32xf32, #tpu.memory_space<vmem>>, vector<32x32xf32>
    %cst_13 = arith.constant dense<0.000000e+00> : vector<8x32xf32>
    %13 = tpu.matmul %11, %12, %cst_13 {dimension_numbers = #tpu.dot_dimension_numbers<[1], [0], [0], [1], [0, 0, 1, 1], [], []>} : vector<8x32xf32>, vector<32x32xf32>, vector<8x32xf32> -> vector<8x32xf32>
    %c1 = arith.constant 1 : index
    %c0_14 = arith.constant 0 : index
    %14 = vector.load %arg7[%c1, %c0_14] : memref<2x32xf32, #tpu.memory_space<vmem>>, vector<1x32xf32>
    %15 = vector.broadcast %14 : vector<1x32xf32> to vector<8x32xf32>
    %16 = arith.addf %13, %15 : vector<8x32xf32>
    %cst_15 = arith.constant 0.000000e+00 : f32
    %17 = vector.broadcast %cst_15 : f32 to vector<8x32xf32>
    %18 = arith.maximumf %16, %17 : vector<8x32xf32>
    %c0_16 = arith.constant 0 : index
    %c0_17 = arith.constant 0 : index
    %19 = vector.load %arg6[%c0_16, %c0_17] : memref<8x32xf32, #tpu.memory_space<vmem>>, vector<8x32xf32>
    %cst_18 = arith.constant dense<0.000000e+00> : vector<8x8xf32>
    %20 = tpu.matmul %19, %18, %cst_18 {dimension_numbers = #tpu.dot_dimension_numbers<[1], [1], [0], [0], [0, 0, 1, 0], [], []>} : vector<8x32xf32>, vector<8x32xf32>, vector<8x8xf32> -> vector<8x8xf32>
    %21 = vector.extract_strided_slice %20 {offsets = [0, 0], sizes = [1, 8], strides = [1, 1]} : vector<8x8xf32> to vector<1x8xf32>
    %c0_19 = arith.constant 0 : index
    %c0_20 = arith.constant 0 : index
    %22 = vector.load %arg8[%c0_19, %c0_20] : memref<1x1xf32, #tpu.memory_space<vmem>>, vector<1x1xf32>
    %23 = vector.broadcast %22 : vector<1x1xf32> to vector<1x8xf32>
    %24 = arith.addf %21, %23 : vector<1x8xf32>
    %c0_21 = arith.constant 0 : index
    %c0_22 = arith.constant 0 : index
    %25 = vector.load %arg9[%c0_21, %c0_22] : memref<1x8xf32, #tpu.memory_space<vmem>>, vector<1x8xf32>
    tpu.vector_store %arg9[%c0_21, %c0_22], %24 {strides = array<i32>} : memref<1x8xf32, #tpu.memory_space<vmem>>, vector<1x8xf32>,
    return
  }
  func.func @transform_0(%arg0: i32) -> (i32, i32) {
    %c0_i32 = arith.constant 0 : i32
    %c0_i32_0 = arith.constant 0 : i32
    return %arg0, %c0_i32 : i32, i32
  }
  func.func @transform_1(%arg0: i32) -> (i32, i32) {
    %c0_i32 = arith.constant 0 : i32
    %c0_i32_0 = arith.constant 0 : i32
    return %arg0, %c0_i32 : i32, i32
  }
  func.func @transform_2(%arg0: i32) -> (i32, i32) {
    %c0_i32 = arith.constant 0 : i32
    %c0_i32_0 = arith.constant 0 : i32
    %c0_i32_1 = arith.constant 0 : i32
    return %c0_i32, %c0_i32_0 : i32, i32
  }
  func.func @transform_3(%arg0: i32) -> (i32, i32) {
    %c0_i32 = arith.constant 0 : i32
    %c0_i32_0 = arith.constant 0 : i32
    %c0_i32_1 = arith.constant 0 : i32
    return %c0_i32, %c0_i32_0 : i32, i32
  }
  func.func @transform_4(%arg0: i32) -> (i32, i32) {
    %c0_i32 = arith.constant 0 : i32
    %c0_i32_0 = arith.constant 0 : i32
    %c0_i32_1 = arith.constant 0 : i32
    return %c0_i32, %c0_i32_0 : i32, i32
  }
  func.func @transform_5(%arg0: i32) -> (i32, i32) {
    %c0_i32 = arith.constant 0 : i32
    %c0_i32_0 = arith.constant 0 : i32
    %c0_i32_1 = arith.constant 0 : i32
    return %c0_i32, %c0_i32_0 : i32, i32
  }
  func.func @transform_6(%arg0: i32) -> (i32, i32) {
    %c0_i32 = arith.constant 0 : i32
    %c0_i32_0 = arith.constant 0 : i32
    %c0_i32_1 = arith.constant 0 : i32
    return %c0_i32, %c0_i32_0 : i32, i32
  }
  func.func @transform_7(%arg0: i32) -> (i32, i32) {
    %c0_i32 = arith.constant 0 : i32
    %c0_i32_0 = arith.constant 0 : i32
    %c0_i32_1 = arith.constant 0 : i32
    return %c0_i32, %c0_i32_0 : i32, i32
  }
  func.func @transform_8(%arg0: i32) -> (i32, i32) {
    %c0_i32 = arith.constant 0 : i32
    %c0_i32_0 = arith.constant 0 : i32
    return %c0_i32, %arg0 : i32, i32
  }
}

</mosaic_0001>

<llo_original>
// kernel: tpu_custom_call.1
$region0: #{tpu_custom_call.1}
  #allocation0 [shape = 'u32[]', space=smem, size = 0x4, offset = 0x4, fixed_abs, tag = 'smem constant byte address 0x4 - core index']
  #allocation1 [shape = 'u32[144,128]{1,0:T(1,128)}', space=vmem, size = 0x12000, scoped, tag = 'internal scratch']
  #allocation2 [shape = 'f32[1,1]{1,0:T(1,128)S(1)}', space=vmem, size = 0x200, scoped, tag = 'scoped memory for tpu_custom_call.1']
  %s0 = inlined_call_operand.vmem [shape: f32[8,6], index: 0, kind: input, shape index: {}]
  %s1 = inlined_call_operand.vmem [shape: f32[8,2], index: 1, kind: input, shape index: {}]
  %s2 = inlined_call_operand.vmem [shape: f32[6,32], index: 2, kind: input, shape index: {}]
  %s3 = inlined_call_operand.hbm [shape: f32[2,32], index: 3, kind: input, shape index: {}]
  %s4 = inlined_call_operand.hbm [shape: f32[32,32], index: 4, kind: input, shape index: {}]
  %s5 = inlined_call_operand.vmem [shape: f32[8,32], index: 5, kind: input, shape index: {}]
  %s6 = inlined_call_operand.vmem [shape: f32[2,32], index: 6, kind: input, shape index: {}]
  %s7 = inlined_call_operand.<no memory space> [shape: f32[1,1], index: 7, kind: input, shape index: {}]
  %s8 = inlined_call_operand.hbm [shape: f32[1,8], index: 8, kind: output, shape index: {}]
  %s9 = sld [smem:[#allocation0]]
  $region50: #{tpu_custom_call.1} parent=0
    _
  %s11 = ssub.s32 1, %s9
  %s12 = scalar_select 0, %s11, %s9
  %v13 = vstv %s7
  %14 = vst [vmem:[#allocation2] sm:$0x1] %v13
  $region1: #{tpu_custom_call.1} parent=0
    #allocation3 [shape = 'u8[1024]{0}', space=vmem, size = 0x400, scoped, tag = 'input window, operand 3, single buffered']
    #allocation4 [shape = 's32[1]{0}', space=sflag, size = 0x4, scoped, tag = 'scoped memory for tpu_custom_call.1']
    #allocation5 [shape = 's32[1]{0}', space=sflag, size = 0x4, scoped, tag = 'scoped memory for tpu_custom_call.1']
    #allocation6 [shape = 'u8[16384]{0}', space=vmem, size = 0x4000, scoped, tag = 'input window, operand 4, single buffered']
    #allocation7 [shape = 's32[1]{0}', space=sflag, size = 0x4, scoped, tag = 'scoped memory for tpu_custom_call.1']
    #allocation8 [shape = 'u8[512]{0}', space=vmem, size = 0x400, scoped, tag = 'output window, operand 0, single buffered']
    %15 = vsyncpa [#allocation4], 0
    %16 = vsyncpa [#allocation7], 0
    %17 = vsyncpa [#allocation5], 0
    // Predicated region
    $region2: #{tpu_custom_call.1} parent=1 // pred_check
      _
    $region3: #{tpu_custom_call.1} parent=1 // pred_check_branch
      %19 = sbr.rel (0) target = $region5
    $region4: #{tpu_custom_call.1} parent=1 // pred_region
      _
    $region5: #{tpu_custom_call.1} parent=1 // pred_fallthru
      _
    // Predicated region
    $region6: #{tpu_custom_call.1} parent=1 // pred_check
      _
    $region7: #{tpu_custom_call.1} parent=1 // pred_check_branch
      %21 = sbr.rel (0) target = $region9
    $region8: #{tpu_custom_call.1} parent=1 // pred_region
      _
    $region9: #{tpu_custom_call.1} parent=1 // pred_fallthru
      _
    // Predicated region
    $region10: #{tpu_custom_call.1} parent=1 // pred_check
      _
    $region11: #{tpu_custom_call.1} parent=1 // pred_check_branch
      %23 = sbr.rel (0) target = $region13
    $region12: #{tpu_custom_call.1} parent=1 // pred_region
      _
    $region13: #{tpu_custom_call.1} parent=1 // pred_fallthru
      _
    // Predicated region
    $region14: #{tpu_custom_call.1} parent=1 // pred_check
      _
    $region15: #{tpu_custom_call.1} parent=1 // pred_check_branch
      %25 = sbr.rel (0) target = $region17
    $region16: #{tpu_custom_call.1} parent=1 // pred_region
      %s27 = ssub.s32 32, 32
      %28 = vsyncadd [#allocation4], %s27
      %s30 = sshll.u32 [#allocation3], 4
      %s31 = int_to_ptr.vmem [resolvable:$true] %s30
      %33 = dma.hbm_to_vmem [thread:$0]  %s3, 32, %s31, [#allocation4]
    $region17: #{tpu_custom_call.1} parent=1 // pred_fallthru
      _
    // Predicated region
    $region18: #{tpu_custom_call.1} parent=1 // pred_check
      _
    $region19: #{tpu_custom_call.1} parent=1 // pred_check_branch
      %35 = sbr.rel (0) target = $region21
    $region20: #{tpu_custom_call.1} parent=1 // pred_region
      %s37 = ssub.s32 512, 512
      %38 = vsyncadd [#allocation7], %s37
      %s39 = sshll.u32 [#allocation6], 4
      %s40 = int_to_ptr.vmem [resolvable:$true] %s39
      %45 = dma.hbm_to_vmem [thread:$0]  %s4, 512, %s40, [#allocation7], 128, 128, 8
    $region21: #{tpu_custom_call.1} parent=1 // pred_fallthru
      _
    // Predicated region
    $region22: #{tpu_custom_call.1} parent=1 // pred_check
      _
    $region23: #{tpu_custom_call.1} parent=1 // pred_check_branch
      %47 = sbr.rel (0) target = $region25
    $region24: #{tpu_custom_call.1} parent=1 // pred_region
      _
    $region25: #{tpu_custom_call.1} parent=1 // pred_fallthru
      _
    // Predicated region
    $region26: #{tpu_custom_call.1} parent=1 // pred_check
      _
    $region27: #{tpu_custom_call.1} parent=1 // pred_check_branch
      %49 = sbr.rel (0) target = $region29
    $region28: #{tpu_custom_call.1} parent=1 // pred_region
      _
    $region29: #{tpu_custom_call.1} parent=1 // pred_fallthru
      _
    // Predicated region
    $region30: #{tpu_custom_call.1} parent=1 // pred_check
      _
    $region31: #{tpu_custom_call.1} parent=1 // pred_check_branch
      %51 = sbr.rel (0) target = $region33
    $region32: #{tpu_custom_call.1} parent=1 // pred_region
      _
    $region33: #{tpu_custom_call.1} parent=1 // pred_fallthru
      _
    // Predicated region
    $region34: #{tpu_custom_call.1} parent=1 // pred_check
      _
    $region35: #{tpu_custom_call.1} parent=1 // pred_check_branch
      %53 = sbr.rel (0) target = $region37
    $region36: #{tpu_custom_call.1} parent=1 // pred_region
      %54 = dma.done [#allocation4], 32
    $region37: #{tpu_custom_call.1} parent=1 // pred_fallthru
      _
    // Predicated region
    $region38: #{tpu_custom_call.1} parent=1 // pred_check
      _
    $region39: #{tpu_custom_call.1} parent=1 // pred_check_branch
      %56 = sbr.rel (0) target = $region41
    $region40: #{tpu_custom_call.1} parent=1 // pred_region
      %57 = dma.done [#allocation7], 512
    $region41: #{tpu_custom_call.1} parent=1 // pred_fallthru
      _
    %v58 = vld [vmem:[%s0] sm:$0xff]
    %v59 = vld [vmem:[%s1] sm:$0xff]
    %v60 = vld [vmem:[%s2] sm:$0x3f]
    %v61 = vld [vmem:[#allocation3] sm:$0x3]
    %vm62 = vcmask 15360
    %v64 = vsel %vm62, %v59, 0
    %vm66 = vcmask 1041408
    %v68 = vsel %vm66, %v61, 0
    %70 = vmatprep.subr.mxu0 0.0
    %71 = vmatpush1.msra.mxu0 %v68
    %72 = vmatprep.subr.mxu0 0.0
    %73 = vmatpush1.msra.mxu0 0.0
    %74 = vmatprep.subr.mxu0 0.0
    %75 = vmatpush1.msra.mxu0 0.0
    %76 = vmatprep.subr.mxu0 0.0
    %77 = vmatpush1.msra.mxu0 0.0
    %78 = vmatprep.subr.mxu0 0.0
    %79 = vmatpush1.msra.mxu0 0.0
    %80 = vmatprep.subr.mxu0 0.0
    %81 = vmatpush1.msra.mxu0 0.0
    %82 = vmatprep.subr.mxu0 0.0
    %83 = vmatpush1.msra.mxu0 0.0
    %84 = vmatprep.subr.mxu0 0.0
    %85 = vmatpush1.msra.mxu0 0.0
    %86 = vmatprep.subr.mxu0 0.0
    %87 = vmatpush1.msra.mxu0 0.0
    %88 = vmatprep.subr.mxu0 0.0
    %89 = vmatpush1.msra.mxu0 0.0
    %90 = vmatprep.subr.mxu0 0.0
    %91 = vmatpush1.msra.mxu0 0.0
    %92 = vmatprep.subr.mxu0 0.0
    %93 = vmatpush1.msra.mxu0 0.0
    %94 = vmatprep.subr.mxu0 0.0
    %95 = vmatpush1.msra.mxu0 0.0
    %96 = vmatprep.subr.mxu0 0.0
    %97 = vmatpush1.msra.mxu0 0.0
    %98 = vmatprep.subr.mxu0 0.0
    %99 = vmatpush1.msra.mxu0 0.0
    %100 = vmatprep.subr.mxu0 0.0
    %101 = vmatpush1.msra.mxu0 0.0
    %102 = vmatprep.subr.mxu0 0.0
    %103 = vmatpush1.msra.mxu0 0.0
    %104 = vmatprep.subr.mxu0 0.0
    %105 = vmatpush1.msra.mxu0 0.0
    %106 = vmatprep.subr.mxu0 0.0
    %107 = vmatpush1.msra.mxu0 0.0
    %108 = vmatprep.subr.mxu0 0.0
    %109 = vmatpush1.msra.mxu0 0.0
    %110 = vmatprep.subr.mxu0 0.0
    %111 = vmatpush1.msra.mxu0 0.0
    %112 = vmatprep.subr.mxu0 0.0
    %113 = vmatpush1.msra.mxu0 0.0
    %114 = vmatprep.subr.mxu0 0.0
    %115 = vmatpush1.msra.mxu0 0.0
    %116 = vmatprep.subr.mxu0 0.0
    %117 = vmatpush1.msra.mxu0 0.0
    %118 = vmatprep.subr.mxu0 0.0
    %119 = vmatpush1.msra.mxu0 0.0
    %120 = vmatprep.subr.mxu0 0.0
    %121 = vmatpush1.msra.mxu0 0.0
    %122 = vmatprep.subr.mxu0 0.0
    %123 = vmatpush1.msra.mxu0 0.0
    %124 = vmatprep.subr.mxu0 0.0
    %125 = vmatpush1.msra.mxu0 0.0
    %126 = vmatprep.subr.mxu0 0.0
    %127 = vmatpush1.msra.mxu0 0.0
    %128 = vmatprep.subr.mxu0 0.0
    %129 = vmatpush1.msra.mxu0 0.0
    %130 = vmatprep.subr.mxu0 0.0
    %131 = vmatpush1.msra.mxu0 0.0
    %132 = vmatprep.subr.mxu0 0.0
    %133 = vmatpush1.msra.mxu0 0.0
    %134 = vmatprep.mubr.f32.mxu0 0.0
    %135 = vmatmul.mubr.f32.gmra.mrb[0].mxu0 %v64
    %v136 = vpop.f32.mrb[0].mxu0
    %v137 = vadd.f32 0.0, %v136
    %v138 = vpop.f32.mrb[0].mxu0
    %139 = vdwg.mxu0
    %vm140 = vcmask 48128
    %v142 = vsel %vm140, %v58, 0
    %vm144 = vcmask 1045504
    %v146 = vsel %vm144, %v60, 0
    %148 = vmatprep.subr.mxu0 0.0
    %149 = vmatpush1.msra.mxu0 %v146
    %150 = vmatprep.subr.mxu0 0.0
    %151 = vmatpush1.msra.mxu0 0.0
    %152 = vmatprep.subr.mxu0 0.0
    %153 = vmatpush1.msra.mxu0 0.0
    %154 = vmatprep.subr.mxu0 0.0
    %155 = vmatpush1.msra.mxu0 0.0
    %156 = vmatprep.subr.mxu0 0.0
    %157 = vmatpush1.msra.mxu0 0.0
    %158 = vmatprep.subr.mxu0 0.0
    %159 = vmatpush1.msra.mxu0 0.0
    %160 = vmatprep.subr.mxu0 0.0
    %161 = vmatpush1.msra.mxu0 0.0
    %162 = vmatprep.subr.mxu0 0.0
    %163 = vmatpush1.msra.mxu0 0.0
    %164 = vmatprep.subr.mxu0 0.0
    %165 = vmatpush1.msra.mxu0 0.0
    %166 = vmatprep.subr.mxu0 0.0
    %167 = vmatpush1.msra.mxu0 0.0
    %168 = vmatprep.subr.mxu0 0.0
    %169 = vmatpush1.msra.mxu0 0.0
    %170 = vmatprep.subr.mxu0 0.0
    %171 = vmatpush1.msra.mxu0 0.0
    %172 = vmatprep.subr.mxu0 0.0
    %173 = vmatpush1.msra.mxu0 0.0
    %174 = vmatprep.subr.mxu0 0.0
    %175 = vmatpush1.msra.mxu0 0.0
    %176 = vmatprep.subr.mxu0 0.0
    %177 = vmatpush1.msra.mxu0 0.0
    %178 = vmatprep.subr.mxu0 0.0
    %179 = vmatpush1.msra.mxu0 0.0
    %180 = vmatprep.subr.mxu0 0.0
    %181 = vmatpush1.msra.mxu0 0.0
    %182 = vmatprep.subr.mxu0 0.0
    %183 = vmatpush1.msra.mxu0 0.0
    %184 = vmatprep.subr.mxu0 0.0
    %185 = vmatpush1.msra.mxu0 0.0
    %186 = vmatprep.subr.mxu0 0.0
    %187 = vmatpush1.msra.mxu0 0.0
    %188 = vmatprep.subr.mxu0 0.0
    %189 = vmatpush1.msra.mxu0 0.0
    %190 = vmatprep.subr.mxu0 0.0
    %191 = vmatpush1.msra.mxu0 0.0
    %192 = vmatprep.subr.mxu0 0.0
    %193 = vmatpush1.msra.mxu0 0.0
    %194 = vmatprep.subr.mxu0 0.0
    %195 = vmatpush1.msra.mxu0 0.0
    %196 = vmatprep.subr.mxu0 0.0
    %197 = vmatpush1.msra.mxu0 0.0
    %198 = vmatprep.subr.mxu0 0.0
    %199 = vmatpush1.msra.mxu0 0.0
    %200 = vmatprep.subr.mxu0 0.0
    %201 = vmatpush1.msra.mxu0 0.0
    %202 = vmatprep.subr.mxu0 0.0
    %203 = vmatpush1.msra.mxu0 0.0
    %204 = vmatprep.subr.mxu0 0.0
    %205 = vmatpush1.msra.mxu0 0.0
    %206 = vmatprep.subr.mxu0 0.0
    %207 = vmatpush1.msra.mxu0 0.0
    %208 = vmatprep.subr.mxu0 0.0
    %209 = vmatpush1.msra.mxu0 0.0
    %210 = vmatprep.subr.mxu0 0.0
    %211 = vmatpush1.msra.mxu0 0.0
    %212 = vmatprep.mubr.f32.mxu0 0.0
    %213 = vmatmul.mubr.f32.gmra.mrb[0].mxu0 %v142
    %v214 = vpop.f32.mrb[0].mxu0
    %v215 = vadd.f32 %v137, %v214
    %v216 = vpop.f32.mrb[0].mxu0
    %217 = vdwg.mxu0
    %v218 = vld [vmem:[%s6] sm:$0x1]
    %v219 = vlaneseq
    %v220 = vshrl.u32 %v219, 7
    %v221 = vsub.s32 0, %v220
    %v222 = vrot.slane %v218, %v221
    %v223 = vadd.f32 %v215, %v222
    %v224 = vmax.f32 %v223, 0.0
    %v225 = vld [vmem:[#allocation6] sm:$0xff]
    %v226 = vld [vmem:[#allocation6 + $0x8] sm:$0xff]
    %v227 = vld [vmem:[#allocation6 + $0x10] sm:$0xff]
    %v228 = vld [vmem:[#allocation6 + $0x18] sm:$0xff]
    %v229 = vld [vmem:[%s6 + $0x1] sm:$0x1]
    %v230 = vlaneseq
    %v231 = vshrl.u32 %v230, 7
    %v232 = vsub.s32 0, %v231
    %v233 = vrot.slane %v229, %v232
    %vm234 = vcmask 261120
    %v236 = vsel %vm234, %v224, 0
    %238 = vmatprep.subr.mxu0 0.0
    %239 = vmatpush1.msra.mxu0 %v225
    %240 = vmatprep.subr.mxu0 0.0
    %241 = vmatpush1.msra.mxu0 %v226
    %242 = vmatprep.subr.mxu0 0.0
    %243 = vmatpush1.msra.mxu0 %v227
    %244 = vmatprep.subr.mxu0 0.0
    %245 = vmatpush1.msra.mxu0 %v228
    %246 = vmatprep.subr.mxu0 0.0
    %247 = vmatpush1.msra.mxu0 0.0
    %248 = vmatprep.subr.mxu0 0.0
    %249 = vmatpush1.msra.mxu0 0.0
    %250 = vmatprep.subr.mxu0 0.0
    %251 = vmatpush1.msra.mxu0 0.0
    %252 = vmatprep.subr.mxu0 0.0
    %253 = vmatpush1.msra.mxu0 0.0
    %254 = vmatprep.subr.mxu0 0.0
    %255 = vmatpush1.msra.mxu0 0.0
    %256 = vmatprep.subr.mxu0 0.0
    %257 = vmatpush1.msra.mxu0 0.0
    %258 = vmatprep.subr.mxu0 0.0
    %259 = vmatpush1.msra.mxu0 0.0
    %260 = vmatprep.subr.mxu0 0.0
    %261 = vmatpush1.msra.mxu0 0.0
    %262 = vmatprep.subr.mxu0 0.0
    %263 = vmatpush1.msra.mxu0 0.0
    %264 = vmatprep.subr.mxu0 0.0
    %265 = vmatpush1.msra.mxu0 0.0
    %266 = vmatprep.subr.mxu0 0.0
    %267 = vmatpush1.msra.mxu0 0.0
    %268 = vmatprep.subr.mxu0 0.0
    %269 = vmatpush1.msra.mxu0 0.0
    %270 = vmatprep.subr.mxu0 0.0
    %271 = vmatpush1.msra.mxu0 0.0
    %272 = vmatprep.subr.mxu0 0.0
    %273 = vmatpush1.msra.mxu0 0.0
    %274 = vmatprep.subr.mxu0 0.0
    %275 = vmatpush1.msra.mxu0 0.0
    %276 = vmatprep.subr.mxu0 0.0
    %277 = vmatpush1.msra.mxu0 0.0
    %278 = vmatprep.subr.mxu0 0.0
    %279 = vmatpush1.msra.mxu0 0.0
    %280 = vmatprep.subr.mxu0 0.0
    %281 = vmatpush1.msra.mxu0 0.0
    %282 = vmatprep.subr.mxu0 0.0
    %283 = vmatpush1.msra.mxu0 0.0
    %284 = vmatprep.subr.mxu0 0.0
    %285 = vmatpush1.msra.mxu0 0.0
    %286 = vmatprep.subr.mxu0 0.0
    %287 = vmatpush1.msra.mxu0 0.0
    %288 = vmatprep.subr.mxu0 0.0
    %289 = vmatpush1.msra.mxu0 0.0
    %290 = vmatprep.subr.mxu0 0.0
    %291 = vmatpush1.msra.mxu0 0.0
    %292 = vmatprep.subr.mxu0 0.0
    %293 = vmatpush1.msra.mxu0 0.0
    %294 = vmatprep.subr.mxu0 0.0
    %295 = vmatpush1.msra.mxu0 0.0
    %296 = vmatprep.subr.mxu0 0.0
    %297 = vmatpush1.msra.mxu0 0.0
    %298 = vmatprep.subr.mxu0 0.0
    %299 = vmatpush1.msra.mxu0 0.0
    %300 = vmatprep.subr.mxu0 0.0
    %301 = vmatpush1.msra.mxu0 0.0
    %302 = vmatprep.mubr.f32.mxu0 0.0
    %303 = vmatmul.mubr.f32.gmra.mrb[0].mxu0 %v236
    %v304 = vpop.f32.mrb[0].mxu0
    %v305 = vadd.f32 %v233, %v304
    %v306 = vpop.f32.mrb[0].mxu0
    %307 = vdwg.mxu0
    %v308 = vmax.f32 %v305, 0.0
    %v309 = vld [vmem:[%s5] sm:$0xff]
    %v311 = vsel %vm234, %v309, 0
    %v314 = vsel %vm234, %v308, 0
    %316 = vmatprep.subr.mxu0 0.0
    %317 = vmatpush1.xpose.msra.mxu0 %v314
    %318 = vmatprep.subr.mxu0 0.0
    %319 = vmatpush1.xpose.msra.mxu0 0.0
    %320 = vmatprep.subr.mxu0 0.0
    %321 = vmatpush1.xpose.msra.mxu0 0.0
    %322 = vmatprep.subr.mxu0 0.0
    %323 = vmatpush1.xpose.msra.mxu0 0.0
    %324 = vmatprep.subr.mxu0 0.0
    %325 = vmatpush1.xpose.msra.mxu0 0.0
    %326 = vmatprep.subr.mxu0 0.0
    %327 = vmatpush1.xpose.msra.mxu0 0.0
    %328 = vmatprep.subr.mxu0 0.0
    %329 = vmatpush1.xpose.msra.mxu0 0.0
    %330 = vmatprep.subr.mxu0 0.0
    %331 = vmatpush1.xpose.msra.mxu0 0.0
    %332 = vmatprep.subr.mxu0 0.0
    %333 = vmatpush1.xpose.msra.mxu0 0.0
    %334 = vmatprep.subr.mxu0 0.0
    %335 = vmatpush1.xpose.msra.mxu0 0.0
    %336 = vmatprep.subr.mxu0 0.0
    %337 = vmatpush1.xpose.msra.mxu0 0.0
    %338 = vmatprep.subr.mxu0 0.0
    %339 = vmatpush1.xpose.msra.mxu0 0.0
    %340 = vmatprep.subr.mxu0 0.0
    %341 = vmatpush1.xpose.msra.mxu0 0.0
    %342 = vmatprep.subr.mxu0 0.0
    %343 = vmatpush1.xpose.msra.mxu0 0.0
    %344 = vmatprep.subr.mxu0 0.0
    %345 = vmatpush1.xpose.msra.mxu0 0.0
    %346 = vmatprep.subr.mxu0 0.0
    %347 = vmatpush1.xpose.msra.mxu0 0.0
    %348 = vmatprep.subr.mxu0 0.0
    %349 = vmatpush1.xpose.msra.mxu0 0.0
    %350 = vmatprep.subr.mxu0 0.0
    %351 = vmatpush1.xpose.msra.mxu0 0.0
    %352 = vmatprep.subr.mxu0 0.0
    %353 = vmatpush1.xpose.msra.mxu0 0.0
    %354 = vmatprep.subr.mxu0 0.0
    %355 = vmatpush1.xpose.msra.mxu0 0.0
    %356 = vmatprep.subr.mxu0 0.0
    %357 = vmatpush1.xpose.msra.mxu0 0.0
    %358 = vmatprep.subr.mxu0 0.0
    %359 = vmatpush1.xpose.msra.mxu0 0.0
    %360 = vmatprep.subr.mxu0 0.0
    %361 = vmatpush1.xpose.msra.mxu0 0.0
    %362 = vmatprep.subr.mxu0 0.0
    %363 = vmatpush1.xpose.msra.mxu0 0.0
    %364 = vmatprep.subr.mxu0 0.0
    %365 = vmatpush1.xpose.msra.mxu0 0.0
    %366 = vmatprep.subr.mxu0 0.0
    %367 = vmatpush1.xpose.msra.mxu0 0.0
    %368 = vmatprep.subr.mxu0 0.0
    %369 = vmatpush1.xpose.msra.mxu0 0.0
    %370 = vmatprep.subr.mxu0 0.0
    %371 = vmatpush1.xpose.msra.mxu0 0.0
    %372 = vmatprep.subr.mxu0 0.0
    %373 = vmatpush1.xpose.msra.mxu0 0.0
    %374 = vmatprep.subr.mxu0 0.0
    %375 = vmatpush1.xpose.msra.mxu0 0.0
    %376 = vmatprep.subr.mxu0 0.0
    %377 = vmatpush1.xpose.msra.mxu0 0.0
    %378 = vmatprep.subr.mxu0 0.0
    %379 = vmatpush1.xpose.msra.mxu0 0.0
    %380 = vmatprep.mubr.f32.mxu0 0.0
    %381 = vmatmul.mubr.f32.gmra.mrb[0].mxu0 %v311
    %v382 = vpop.f32.mrb[0].mxu0
    %v383 = vadd.f32 0.0, %v382
    %v384 = vpop.f32.mrb[0].mxu0
    %385 = vdwg.mxu0
    %v386 = vld [vmem:[#allocation2] sm:$0x1]
    %388 = vset.pattern.permute.xlu0 0
    %389 = vperm.xlu0 %388, %v386
    %v390 = vpop.permute.xlu0 %389
    %v392 = vlaneseq
    %v393 = vshrl.u32 %v392, 7
    %v394 = vsub.s32 0, %v393
    %v395 = vrot.slane %v390, %v394
    %v396 = vadd.f32 %v383, %v395
    %vm397 = vcmask 57344
    %398 = vst.msk [vmem:[#allocation8] sm:$0x1] %vm397, %v396
    // Predicated region
    $region42: #{tpu_custom_call.1} parent=1 // pred_check
      _
    $region43: #{tpu_custom_call.1} parent=1 // pred_check_branch
      %400 = sbr.rel (0) target = $region45
    $region44: #{tpu_custom_call.1} parent=1 // pred_region
      %s402 = ssub.s32 16, 16
      %403 = vsyncadd [#allocation5], %s402
      %s405 = sshll.u32 [#allocation8], 4
      %s406 = int_to_ptr.vmem [resolvable:$true] %s405
      %408 = dma.vmem_to_hbm [thread:$0]  %s406, 16, %s8, [#allocation5]
    $region45: #{tpu_custom_call.1} parent=1 // pred_fallthru
      _
    // Predicated region
    $region46: #{tpu_custom_call.1} parent=1 // pred_check
      _
    $region47: #{tpu_custom_call.1} parent=1 // pred_check_branch
      %410 = sbr.rel (0) target = $region49
    $region48: #{tpu_custom_call.1} parent=1 // pred_region
      %411 = dma.done [#allocation5], 16
    $region49: #{tpu_custom_call.1} parent=1 // pred_fallthru
      _
    %412 = vsyncpa [#allocation4], 1
    %413 = vsyncpa [#allocation7], 1
    %414 = vsyncpa [#allocation5], 1

</llo_original>
